<compile_context>
chip_gen: v7x
topology: tpu7x:2x2x1
jax: 0.10.0
libtpu: 0.0.40
codegen_flags: <defaults>
</compile_context>

<pallas_src>
import functools

import jax
import jax.numpy as jnp
from jax.experimental import pallas as pl
from jax.experimental.pallas import tpu as pltpu

INPUT_DIM = 300
HID1 = 128
HID2 = 64
OUTPUT_DIM = 250
BN_EPS = 1e-5

AFF_ROWS = 8     # rows 0-1: g1/beta1, 2-3: g2/beta2, 4-5: g3/beta3, rest 0
AFF_COLS = 256


# ----------------------------------------------------------------------------
# Whole-batch (grid-less) kernel: best at small / moderate B (latency-bound).
# ----------------------------------------------------------------------------
def _global_dnn_kernel(x_ref, w1_ref, w2_ref, w3_ref, aff_ref, o_ref):
    inv_b = jnp.float32(1.0 / x_ref.shape[0])

    def lin_bn(h_in, w_ref, gamma, beta, act):
        # Linear (no bias: exactly absorbed by the BN mean subtraction).
        z = jnp.dot(h_in, w_ref[...], preferred_element_type=jnp.float32)
        # Training-mode BN, centered (two-pass) biased variance.
        mean = jnp.sum(z, axis=0, keepdims=True) * inv_b
        zc = z - mean
        var = jnp.sum(zc * zc, axis=0, keepdims=True) * inv_b
        # Folded affine: 2 VPU ops on the (B, d) tensor.
        scale = gamma * jax.lax.rsqrt(var + BN_EPS)
        return act(zc * scale + beta)
        # TODO(synk): on v6e/v7x the column sums could be moved onto the idle
        # MXU (ones(1,B) @ z) if the BN reduction phase shows up in profiles.

    relu = lambda v: jnp.maximum(v, 0.0)
    h = lin_bn(x_ref[...], w1_ref, aff_ref[0:1, :HID1], aff_ref[1:2, :HID1], relu)
    h = lin_bn(h, w2_ref, aff_ref[2:3, :HID2], aff_ref[3:4, :HID2], relu)
    o_ref[...] = lin_bn(h, w3_ref, aff_ref[4:5, :OUTPUT_DIM],
                        aff_ref[5:6, :OUTPUT_DIM], jax.nn.sigmoid)


def _cost_estimate(B):
    flops = 2 * B * (INPUT_DIM * HID1 + HID1 * HID2 + HID2 * OUTPUT_DIM)
    bytes_accessed = 4 * (B * INPUT_DIM + B * OUTPUT_DIM
                          + INPUT_DIM * HID1 + HID1 * HID2 + HID2 * OUTPUT_DIM
                          + AFF_ROWS * AFF_COLS)
    transcendentals = B * OUTPUT_DIM + 3 * OUTPUT_DIM  # sigmoid exps + rsqrts
    return pl.CostEstimate(flops=flops, transcendentals=transcendentals,
                           bytes_accessed=bytes_accessed)


def _forward_whole_batch(x, pp):
    B = x.shape[0]
    weight_bytes = 4 * (INPUT_DIM * HID1 + HID1 * HID2 + HID2 * OUTPUT_DIM
                        + AFF_ROWS * AFF_COLS)
    act_bytes = 4 * B * (INPUT_DIM + 2 * (HID1 + HID2 + OUTPUT_DIM) + OUTPUT_DIM)
    vmem_limit = int(min(64 << 20, max(32 << 20,
                                       weight_bytes + act_bytes + (4 << 20))))
    vmem = pl.BlockSpec(memory_space=pltpu.MemorySpace.VMEM)
    return pl.pallas_call(
        _global_dnn_kernel,
        out_shape=jax.ShapeDtypeStruct((B, OUTPUT_DIM), jnp.float32),
        in_specs=[vmem] * 5,
        out_specs=vmem,
        cost_estimate=_cost_estimate(B),
        compiler_params=pltpu.CompilerParams(vmem_limit_bytes=vmem_limit),
    )(x, pp["w1"], pp["w2"], pp["w3"], pp["aff"])


# ----------------------------------------------------------------------------
# Batch-tiled multi-sweep path: for large B (VMEM-capped whole-batch design)
# and for v7x (64 MiB VMEM, 2 TensorCores).  Each sweep is batch-parallel:
#   sweep k: read pre-BN z_{k} tile -> normalize+ReLU (folded affine) ->
#            matmul with W_{k+1} -> write pre-BN z_{k+1} tile + per-tile
#            (sum, centered-M2) partial stats.
# Partial stats are merged in plain JAX (tiny (1,d) math) between sweeps.
# ----------------------------------------------------------------------------
def _sweep_kernel(z_ref, scale_ref, shift_ref, w_ref, zo_ref, sum_ref, m2_ref,
                  *, apply_prev, inv_tb):
    h = z_ref[...]
    if apply_prev:
        h = jnp.maximum(h * scale_ref[...] + shift_ref[...], 0.0)
    z = jnp.dot(h, w_ref[...], preferred_element_type=jnp.float32)
    zo_ref[...] = z
    s = jnp.sum(z, axis=0, keepdims=True)          # (1, d_out)
    zc = z - s * inv_tb                            # centered within the tile
    m2 = jnp.sum(zc * zc, axis=0, keepdims=True)   # (1, d_out)
    sum_ref[...] = s[None]                         # (1, 1, d_out)
    m2_ref[...] = m2[None]


def _final_kernel(z_ref, scale_ref, shift_ref, o_ref):
    o_ref[...] = jax.nn.sigmoid(z_ref[...] * scale_ref[...] + shift_ref[...])


def _sweep(z, scale, shift, w, *, apply_prev, tb):
    B, d_in = z.shape
    d_out = w.shape[1]
    nt = B // tb
    kernel = functools.partial(_sweep_kernel, apply_prev=apply_prev,
                               inv_tb=float(1.0 / tb))
    return pl.pallas_call(
        kernel,
        grid=(nt,),
        in_specs=[pl.BlockSpec((tb, d_in), lambda i: (i, 0)),
                  pl.BlockSpec((1, d_in), lambda i: (0, 0)),
                  pl.BlockSpec((1, d_in), lambda i: (0, 0)),
                  pl.BlockSpec((d_in, d_out), lambda i: (0, 0))],
        out_specs=(pl.BlockSpec((tb, d_out), lambda i: (i, 0)),
                   pl.BlockSpec((1, 1, d_out), lambda i: (i, 0, 0)),
                   pl.BlockSpec((1, 1, d_out), lambda i: (i, 0, 0))),
        out_shape=(jax.ShapeDtypeStruct((B, d_out), jnp.float32),
                   jax.ShapeDtypeStruct((nt, 1, d_out), jnp.float32),
                   jax.ShapeDtypeStruct((nt, 1, d_out), jnp.float32)),
        compiler_params=pltpu.CompilerParams(
            dimension_semantics=("parallel",)),
    )(z, scale, shift, w)


def _final_sweep(z, scale, shift, *, tb):
    B, d = z.shape
    nt = B // tb
    return pl.pallas_call(
        _final_kernel,
        grid=(nt,),
        in_specs=[pl.BlockSpec((tb, d), lambda i: (i, 0)),
                  pl.BlockSpec((1, d), lambda i: (0, 0)),
                  pl.BlockSpec((1, d), lambda i: (0, 0))],
        out_specs=pl.BlockSpec((tb, d), lambda i: (i, 0)),
        out_shape=jax.ShapeDtypeStruct((B, d), jnp.float32),
        compiler_params=pltpu.CompilerParams(
            dimension_semantics=("parallel",)),
    )(z, scale, shift)


def _bn_scale_shift(sums, m2s, gamma, beta, b, tb):
    """Chan parallel-variance merge of per-tile (sum, centered-M2) partials,
    then fold BN into per-feature (scale, shift)."""
    mean = jnp.sum(sums, axis=0) / b                          # (1, d)
    tile_mean = sums * (1.0 / tb)                             # (nt, 1, d)
    m2 = jnp.sum(m2s, axis=0) + tb * jnp.sum((tile_mean - mean) ** 2, axis=0)
    var = m2 / b
    scale = gamma * jax.lax.rsqrt(var + BN_EPS)
    shift = beta - mean * scale
    return scale, shift


def _forward_batch_tiled(x, pp, tb):
    B = x.shape[0]
    dummy = jnp.zeros((1, x.shape[1]), jnp.float32)  # unused in sweep 0
    z1, s1, m1 = _sweep(x, dummy, dummy, pp["w1"], apply_prev=False, tb=tb)
    sc1, sh1 = _bn_scale_shift(s1, m1, pp["g1"], pp["be1"], B, tb)
    z2, s2, m2 = _sweep(z1, sc1, sh1, pp["w2"], apply_prev=True, tb=tb)
    sc2, sh2 = _bn_scale_shift(s2, m2, pp["g2"], pp["be2"], B, tb)
    z3, s3, m3 = _sweep(z2, sc2, sh2, pp["w3"], apply_prev=True, tb=tb)
    sc3, sh3 = _bn_scale_shift(s3, m3, pp["g3"], pp["be3"], B, tb)
    return _final_sweep(z3, sc3, sh3, tb=tb)


# ----------------------------------------------------------------------------
# Public entry point.
# ----------------------------------------------------------------------------
def global_dnn_forward(x, pp, *, batch_tile=1024):
    """x: (B, 300) f32; pp: prepare_params() output. Returns (B, 250).

    Small / moderate B uses the single whole-batch kernel (latency-bound;
    weights re-DMA'd per call dominates there).  Large B (and v7x) uses the
    batch-tiled multi-sweep path, which keeps VMEM bounded, overlaps DMA with
    compute, and exposes a 'parallel' batch axis."""
    B = x.shape[0]
    if batch_tile is None or B <= batch_tile or B % batch_tile != 0:
        # TODO(synk): mask a ragged last tile so the tiled path covers any B;
        # until then fall back to the whole-batch kernel.
        return _forward_whole_batch(x, pp)
    return _forward_batch_tiled(x, pp, batch_tile)


# ----------------------------------------------------------------------------
# Parameters / reference.
# ----------------------------------------------------------------------------
def init_params(key):
    """Natural (torch-equivalent) parameters; W stored as (in, out)."""
    ks = jax.random.split(key, 6)

    def linear(kw, kb, d_in, d_out):
        bound = 1.0 / (d_in ** 0.5)
        w = jax.random.uniform(kw, (d_in, d_out), jnp.float32, -bound, bound)
        b = jax.random.uniform(kb, (1, d_out), jnp.float32, -bound, bound)
        return w, b

    w1, b1 = linear(ks[0], ks[1], INPUT_DIM, HID1)
    w2, b2 = linear(ks[2], ks[3], HID1, HID2)
    w3, b3 = linear(ks[4], ks[5], HID2, OUTPUT_DIM)
    ones = lambda d: jnp.ones((1, d), jnp.float32)
    zeros = lambda d: jnp.zeros((1, d), jnp.float32)
    return {"w1": w1, "b1": b1, "g1": ones(HID1), "be1": zeros(HID1),
            "w2": w2, "b2": b2, "g2": ones(HID2), "be2": zeros(HID2),
            "w3": w3, "b3": b3, "g3": ones(OUTPUT_DIM), "be3": zeros(OUTPUT_DIM)}


def prepare_params(p):
    """One-time layout plumbing.  Linear biases are intentionally dropped: a
    bias followed by training-mode BatchNorm is exactly cancelled by the mean
    subtraction.  gamma/beta are packed into one (8, 256) slab (single DMA)
    for the whole-batch kernel and also kept as (1, d) vectors for the tiled
    path."""
    aff = jnp.zeros((AFF_ROWS, AFF_COLS), jnp.float32)
    aff = aff.at[0, :HID1].set(p["g1"][0])
    aff = aff.at[1, :HID1].set(p["be1"][0])
    aff = aff.at[2, :HID2].set(p["g2"][0])
    aff = aff.at[3, :HID2].set(p["be2"][0])
    aff = aff.at[4, :OUTPUT_DIM].set(p["g3"][0])
    aff = aff.at[5, :OUTPUT_DIM].set(p["be3"][0])
    return {"w1": p["w1"], "w2": p["w2"], "w3": p["w3"], "aff": aff,
            "g1": p["g1"], "be1": p["be1"],
            "g2": p["g2"], "be2": p["be2"],
            "g3": p["g3"], "be3": p["be3"]}


def _reference_forward(x, p):
    """Pure-JAX reference of the torch forward (training-mode BN, with bias)."""
    def bn(h, g, b):
        m = jnp.mean(h, axis=0, keepdims=True)
        v = jnp.mean((h - m) ** 2, axis=0, keepdims=True)
        return g * (h - m) / jnp.sqrt(v + BN_EPS) + b

    h = x @ p["w1"] + p["b1"]
    h = jnp.maximum(bn(h, p["g1"], p["be1"]), 0.0)
    h = h @ p["w2"] + p["b2"]
    h = jnp.maximum(bn(h, p["g2"], p["be2"]), 0.0)
    h = h @ p["w3"] + p["b3"]
    return jax.nn.sigmoid(bn(h, p["g3"], p["be3"]))


if __name__ == "__main__":
    key = jax.random.PRNGKey(0)
    k_x, k_p, k_x2 = jax.random.split(key, 3)

    params = init_params(k_p)
    packed = prepare_params(params)

    # Whole-batch (grid-less) path, small batch (BatchNorm1d needs B > 1).
    B = 8
    x = jax.random.normal(k_x, (B, INPUT_DIM), jnp.float32)
    out = jax.block_until_ready(global_dnn_forward(x, packed))
    ref = _reference_forward(x, params)
    assert out.shape == (B, OUTPUT_DIM)
    err = float(jnp.max(jnp.abs(out - ref)))
    assert jnp.allclose(out, ref, atol=1e-5, rtol=1e-5), err

    # Batch-tiled multi-sweep path (small shapes: B=32, tile=8 -> 4 tiles).
    B2, TB = 32, 8
    x2 = jax.random.normal(k_x2, (B2, INPUT_DIM), jnp.float32)
    out2 = jax.block_until_ready(global_dnn_forward(x2, packed, batch_tile=TB))
    ref2 = _reference_forward(x2, params)
    assert out2.shape == (B2, OUTPUT_DIM)
    err2 = float(jnp.max(jnp.abs(out2 - ref2)))
    assert jnp.allclose(out2, ref2, atol=1e-5, rtol=1e-5), err2

    print("KERNEL_OK")
</pallas_src>

<mosaic_0001>
module attributes {stable_mosaic.version = 11 : i64} {
  func.func @_global_dnn_kernel(%arg0: memref<8x300xf32, #tpu.memory_space<vmem>>, %arg1: memref<300x128xf32, #tpu.memory_space<vmem>>, %arg2: memref<128x64xf32, #tpu.memory_space<vmem>>, %arg3: memref<64x250xf32, #tpu.memory_space<vmem>>, %arg4: memref<8x256xf32, #tpu.memory_space<vmem>>, %arg5: memref<8x250xf32, #tpu.memory_space<vmem>>) attributes {dimension_semantics = [], scalar_prefetch = 0 : i64, scratch_operands = 0 : i64, tpu.core_type = #tpu.core_type<tc>} {
    %c0 = arith.constant 0 : index
    %c0_0 = arith.constant 0 : index
    %0 = vector.load %arg0[%c0, %c0_0] : memref<8x300xf32, #tpu.memory_space<vmem>>, vector<8x300xf32>
    %c0_1 = arith.constant 0 : index
    %c0_2 = arith.constant 0 : index
    %1 = vector.load %arg4[%c0_1, %c0_2] : memref<8x256xf32, #tpu.memory_space<vmem>>, vector<1x128xf32>
    %c1 = arith.constant 1 : index
    %c0_3 = arith.constant 0 : index
    %2 = vector.load %arg4[%c1, %c0_3] : memref<8x256xf32, #tpu.memory_space<vmem>>, vector<1x128xf32>
    %c0_4 = arith.constant 0 : index
    %c0_5 = arith.constant 0 : index
    %3 = vector.load %arg1[%c0_4, %c0_5] : memref<300x128xf32, #tpu.memory_space<vmem>>, vector<300x128xf32>
    %cst = arith.constant dense<0.000000e+00> : vector<8x128xf32>
    %4 = tpu.matmul %0, %3, %cst {dimension_numbers = #tpu.dot_dimension_numbers<[1], [0], [0], [1], [0, 0, 1, 1], [], []>} : vector<8x300xf32>, vector<300x128xf32>, vector<8x128xf32> -> vector<8x128xf32>
    %cst_6 = arith.constant dense<0.000000e+00> : vector<128xf32>
    %5 = vector.multi_reduction <add>, %4, %cst_6 [0] : vector<8x128xf32> to vector<128xf32>
    %6 = vector.shape_cast %5 : vector<128xf32> to vector<1x128xf32>
    %cst_7 = arith.constant 1.250000e-01 : f32
    %7 = vector.broadcast %cst_7 : f32 to vector<1x128xf32>
    %8 = arith.mulf %6, %7 : vector<1x128xf32>
    %9 = vector.broadcast %8 : vector<1x128xf32> to vector<8x128xf32>
    %10 = arith.subf %4, %9 : vector<8x128xf32>
    %11 = arith.mulf %10, %10 : vector<8x128xf32>
    %cst_8 = arith.constant dense<0.000000e+00> : vector<128xf32>
    %12 = vector.multi_reduction <add>, %11, %cst_8 [0] : vector<8x128xf32> to vector<128xf32>
    %13 = vector.shape_cast %12 : vector<128xf32> to vector<1x128xf32>
    %cst_9 = arith.constant 1.250000e-01 : f32
    %14 = vector.broadcast %cst_9 : f32 to vector<1x128xf32>
    %15 = arith.mulf %13, %14 : vector<1x128xf32>
    %cst_10 = arith.constant 9.99999974E-6 : f32
    %16 = vector.broadcast %cst_10 : f32 to vector<1x128xf32>
    %17 = arith.addf %15, %16 : vector<1x128xf32>
    %18 = math.rsqrt %17 : vector<1x128xf32>
    %19 = arith.mulf %1, %18 : vector<1x128xf32>
    %20 = vector.broadcast %19 : vector<1x128xf32> to vector<8x128xf32>
    %21 = arith.mulf %10, %20 : vector<8x128xf32>
    %22 = vector.broadcast %2 : vector<1x128xf32> to vector<8x128xf32>
    %23 = arith.addf %21, %22 : vector<8x128xf32>
    %cst_11 = arith.constant 0.000000e+00 : f32
    %24 = vector.broadcast %cst_11 : f32 to vector<8x128xf32>
    %25 = arith.maximumf %23, %24 : vector<8x128xf32>
    %c2 = arith.constant 2 : index
    %c0_12 = arith.constant 0 : index
    %26 = vector.load %arg4[%c2, %c0_12] : memref<8x256xf32, #tpu.memory_space<vmem>>, vector<1x64xf32>
    %c3 = arith.constant 3 : index
    %c0_13 = arith.constant 0 : index
    %27 = vector.load %arg4[%c3, %c0_13] : memref<8x256xf32, #tpu.memory_space<vmem>>, vector<1x64xf32>
    %c0_14 = arith.constant 0 : index
    %c0_15 = arith.constant 0 : index
    %28 = vector.load %arg2[%c0_14, %c0_15] : memref<128x64xf32, #tpu.memory_space<vmem>>, vector<128x64xf32>
    %cst_16 = arith.constant dense<0.000000e+00> : vector<8x64xf32>
    %29 = tpu.matmul %25, %28, %cst_16 {dimension_numbers = #tpu.dot_dimension_numbers<[1], [0], [0], [1], [0, 0, 1, 1], [], []>} : vector<8x128xf32>, vector<128x64xf32>, vector<8x64xf32> -> vector<8x64xf32>
    %cst_17 = arith.constant dense<0.000000e+00> : vector<64xf32>
    %30 = vector.multi_reduction <add>, %29, %cst_17 [0] : vector<8x64xf32> to vector<64xf32>
    %31 = vector.shape_cast %30 : vector<64xf32> to vector<1x64xf32>
    %cst_18 = arith.constant 1.250000e-01 : f32
    %32 = vector.broadcast %cst_18 : f32 to vector<1x64xf32>
    %33 = arith.mulf %31, %32 : vector<1x64xf32>
    %34 = vector.broadcast %33 : vector<1x64xf32> to vector<8x64xf32>
    %35 = arith.subf %29, %34 : vector<8x64xf32>
    %36 = arith.mulf %35, %35 : vector<8x64xf32>
    %cst_19 = arith.constant dense<0.000000e+00> : vector<64xf32>
    %37 = vector.multi_reduction <add>, %36, %cst_19 [0] : vector<8x64xf32> to vector<64xf32>
    %38 = vector.shape_cast %37 : vector<64xf32> to vector<1x64xf32>
    %cst_20 = arith.constant 1.250000e-01 : f32
    %39 = vector.broadcast %cst_20 : f32 to vector<1x64xf32>
    %40 = arith.mulf %38, %39 : vector<1x64xf32>
    %cst_21 = arith.constant 9.99999974E-6 : f32
    %41 = vector.broadcast %cst_21 : f32 to vector<1x64xf32>
    %42 = arith.addf %40, %41 : vector<1x64xf32>
    %43 = math.rsqrt %42 : vector<1x64xf32>
    %44 = arith.mulf %26, %43 : vector<1x64xf32>
    %45 = vector.broadcast %44 : vector<1x64xf32> to vector<8x64xf32>
    %46 = arith.mulf %35, %45 : vector<8x64xf32>
    %47 = vector.broadcast %27 : vector<1x64xf32> to vector<8x64xf32>
    %48 = arith.addf %46, %47 : vector<8x64xf32>
    %cst_22 = arith.constant 0.000000e+00 : f32
    %49 = vector.broadcast %cst_22 : f32 to vector<8x64xf32>
    %50 = arith.maximumf %48, %49 : vector<8x64xf32>
    %c4 = arith.constant 4 : index
    %c0_23 = arith.constant 0 : index
    %51 = vector.load %arg4[%c4, %c0_23] : memref<8x256xf32, #tpu.memory_space<vmem>>, vector<1x250xf32>
    %c5 = arith.constant 5 : index
    %c0_24 = arith.constant 0 : index
    %52 = vector.load %arg4[%c5, %c0_24] : memref<8x256xf32, #tpu.memory_space<vmem>>, vector<1x250xf32>
    %c0_25 = arith.constant 0 : index
    %c0_26 = arith.constant 0 : index
    %53 = vector.load %arg3[%c0_25, %c0_26] : memref<64x250xf32, #tpu.memory_space<vmem>>, vector<64x250xf32>
    %cst_27 = arith.constant dense<0.000000e+00> : vector<8x250xf32>
    %54 = tpu.matmul %50, %53, %cst_27 {dimension_numbers = #tpu.dot_dimension_numbers<[1], [0], [0], [1], [0, 0, 1, 1], [], []>} : vector<8x64xf32>, vector<64x250xf32>, vector<8x250xf32> -> vector<8x250xf32>
    %cst_28 = arith.constant dense<0.000000e+00> : vector<250xf32>
    %55 = vector.multi_reduction <add>, %54, %cst_28 [0] : vector<8x250xf32> to vector<250xf32>
    %56 = vector.shape_cast %55 : vector<250xf32> to vector<1x250xf32>
    %cst_29 = arith.constant 1.250000e-01 : f32
    %57 = vector.broadcast %cst_29 : f32 to vector<1x250xf32>
    %58 = arith.mulf %56, %57 : vector<1x250xf32>
    %59 = vector.broadcast %58 : vector<1x250xf32> to vector<8x250xf32>
    %60 = arith.subf %54, %59 : vector<8x250xf32>
    %61 = arith.mulf %60, %60 : vector<8x250xf32>
    %cst_30 = arith.constant dense<0.000000e+00> : vector<250xf32>
    %62 = vector.multi_reduction <add>, %61, %cst_30 [0] : vector<8x250xf32> to vector<250xf32>
    %63 = vector.shape_cast %62 : vector<250xf32> to vector<1x250xf32>
    %cst_31 = arith.constant 1.250000e-01 : f32
    %64 = vector.broadcast %cst_31 : f32 to vector<1x250xf32>
    %65 = arith.mulf %63, %64 : vector<1x250xf32>
    %cst_32 = arith.constant 9.99999974E-6 : f32
    %66 = vector.broadcast %cst_32 : f32 to vector<1x250xf32>
    %67 = arith.addf %65, %66 : vector<1x250xf32>
    %68 = math.rsqrt %67 : vector<1x250xf32>
    %69 = arith.mulf %51, %68 : vector<1x250xf32>
    %70 = vector.broadcast %69 : vector<1x250xf32> to vector<8x250xf32>
    %71 = arith.mulf %60, %70 : vector<8x250xf32>
    %72 = vector.broadcast %52 : vector<1x250xf32> to vector<8x250xf32>
    %73 = arith.addf %71, %72 : vector<8x250xf32>
    %74 = arith.negf %73 : vector<8x250xf32>
    %75 = math.exp %74 : vector<8x250xf32>
    %cst_33 = arith.constant 1.000000e+00 : f32
    %76 = vector.broadcast %cst_33 : f32 to vector<8x250xf32>
    %77 = arith.addf %76, %75 : vector<8x250xf32>
    %78 = arith.divf %76, %77 : vector<8x250xf32>
    %c0_34 = arith.constant 0 : index
    %c0_35 = arith.constant 0 : index
    %79 = vector.load %arg5[%c0_34, %c0_35] : memref<8x250xf32, #tpu.memory_space<vmem>>, vector<8x250xf32>
    tpu.vector_store %arg5[%c0_34, %c0_35], %78 {strides = array<i32>} : memref<8x250xf32, #tpu.memory_space<vmem>>, vector<8x250xf32>,
    return
  }
}

</mosaic_0001>

<llo_original>
// kernel: tpu_custom_call.1
$region0: #{tpu_custom_call.1}
  #allocation0 [shape = 'u32[]', space=smem, size = 0x4, offset = 0x4, fixed_abs, tag = 'smem constant byte address 0x4 - core index']
  #allocation1 [shape = 'u32[144,128]{1,0:T(1,128)}', space=vmem, size = 0x12000, scoped, tag = 'internal scratch']
  %s0 = inlined_call_operand.vmem [shape: f32[8,300], index: 0, kind: input, shape index: {}]
  %s1 = inlined_call_operand.hbm [shape: f32[300,128], index: 1, kind: input, shape index: {}]
  %s2 = inlined_call_operand.vmem [shape: f32[128,64], index: 2, kind: input, shape index: {}]
  %s3 = inlined_call_operand.vmem [shape: f32[64,250], index: 3, kind: input, shape index: {}]
  %s4 = inlined_call_operand.vmem [shape: f32[8,256], index: 4, kind: input, shape index: {}]
  %s5 = inlined_call_operand.hbm [shape: f32[8,250], index: 5, kind: output, shape index: {}]
  %s6 = sld [smem:[#allocation0]]
  $region34: #{tpu_custom_call.1} parent=0
    _
  %s8 = ssub.s32 1, %s6
  %s9 = scalar_select 0, %s8, %s6
  $region1: #{tpu_custom_call.1} parent=0
    #allocation2 [shape = 'u8[155648]{0}', space=vmem, size = 0x26000, scoped, tag = 'input window, operand 1, single buffered']
    #allocation3 [shape = 's32[1]{0}', space=sflag, size = 0x4, scoped, tag = 'scoped memory for tpu_custom_call.1']
    #allocation4 [shape = 's32[1]{0}', space=sflag, size = 0x4, scoped, tag = 'scoped memory for tpu_custom_call.1']
    #allocation5 [shape = 'u8[8192]{0}', space=vmem, size = 0x2000, scoped, tag = 'output window, operand 0, single buffered']
    %10 = vsyncpa [#allocation3], 0
    %11 = vsyncpa [#allocation4], 0
    // Predicated region
    $region2: #{tpu_custom_call.1} parent=1 // pred_check
      _
    $region3: #{tpu_custom_call.1} parent=1 // pred_check_branch
      %13 = sbr.rel (0) target = $region5
    $region4: #{tpu_custom_call.1} parent=1 // pred_region
      _
    $region5: #{tpu_custom_call.1} parent=1 // pred_fallthru
      _
    // Predicated region
    $region6: #{tpu_custom_call.1} parent=1 // pred_check
      _
    $region7: #{tpu_custom_call.1} parent=1 // pred_check_branch
      %15 = sbr.rel (0) target = $region9
    $region8: #{tpu_custom_call.1} parent=1 // pred_region
      %s17 = ssub.s32 4864, 4864
      %18 = vsyncadd [#allocation3], %s17
      %s19 = sshll.u32 [#allocation2], 4
      %s20 = int_to_ptr.vmem [resolvable:$true] %s19
      %25 = dma.hbm_to_vmem [thread:$0]  %s1, 4864, %s20, [#allocation3], 128, 128, 8
    $region9: #{tpu_custom_call.1} parent=1 // pred_fallthru
      _
    // Predicated region
    $region10: #{tpu_custom_call.1} parent=1 // pred_check
      _
    $region11: #{tpu_custom_call.1} parent=1 // pred_check_branch
      %27 = sbr.rel (0) target = $region13
    $region12: #{tpu_custom_call.1} parent=1 // pred_region
      _
    $region13: #{tpu_custom_call.1} parent=1 // pred_fallthru
      _
    // Predicated region
    $region14: #{tpu_custom_call.1} parent=1 // pred_check
      _
    $region15: #{tpu_custom_call.1} parent=1 // pred_check_branch
      %29 = sbr.rel (0) target = $region17
    $region16: #{tpu_custom_call.1} parent=1 // pred_region
      _
    $region17: #{tpu_custom_call.1} parent=1 // pred_fallthru
      _
    // Predicated region
    $region18: #{tpu_custom_call.1} parent=1 // pred_check
      _
    $region19: #{tpu_custom_call.1} parent=1 // pred_check_branch
      %31 = sbr.rel (0) target = $region21
    $region20: #{tpu_custom_call.1} parent=1 // pred_region
      _
    $region21: #{tpu_custom_call.1} parent=1 // pred_fallthru
      _
    // Predicated region
    $region22: #{tpu_custom_call.1} parent=1 // pred_check
      _
    $region23: #{tpu_custom_call.1} parent=1 // pred_check_branch
      %33 = sbr.rel (0) target = $region25
    $region24: #{tpu_custom_call.1} parent=1 // pred_region
      %34 = dma.done [#allocation3], 4864
    $region25: #{tpu_custom_call.1} parent=1 // pred_fallthru
      _
    %v35 = vld [vmem:[%s0] sm:$0xff]
    %v36 = vld [vmem:[%s0 + $0x8] sm:$0xff]
    %v37 = vld [vmem:[%s0 + $0x10] sm:$0xff]
    %v38 = vld [vmem:[%s4] ss:$0 sm:$0xff]
    %v39 = vld [vmem:[%s4 + $0x1] ss:$0 sm:$0xff]
    %v40 = vld [vmem:[#allocation2] sm:$0xff]
    %v41 = vld [vmem:[#allocation2 + $0x8] sm:$0xff]
    %v42 = vld [vmem:[#allocation2 + $0x10] sm:$0xff]
    %v43 = vld [vmem:[#allocation2 + $0x18] sm:$0xff]
    %v44 = vld [vmem:[#allocation2 + $0x20] sm:$0xff]
    %v45 = vld [vmem:[#allocation2 + $0x28] sm:$0xff]
    %v46 = vld [vmem:[#allocation2 + $0x30] sm:$0xff]
    %v47 = vld [vmem:[#allocation2 + $0x38] sm:$0xff]
    %v48 = vld [vmem:[#allocation2 + $0x40] sm:$0xff]
    %v49 = vld [vmem:[#allocation2 + $0x48] sm:$0xff]
    %v50 = vld [vmem:[#allocation2 + $0x50] sm:$0xff]
    %v51 = vld [vmem:[#allocation2 + $0x58] sm:$0xff]
    %v52 = vld [vmem:[#allocation2 + $0x60] sm:$0xff]
    %v53 = vld [vmem:[#allocation2 + $0x68] sm:$0xff]
    %v54 = vld [vmem:[#allocation2 + $0x70] sm:$0xff]
    %v55 = vld [vmem:[#allocation2 + $0x78] sm:$0xff]
    %v56 = vld [vmem:[#allocation2 + $0x80] sm:$0xff]
    %v57 = vld [vmem:[#allocation2 + $0x88] sm:$0xff]
    %v58 = vld [vmem:[#allocation2 + $0x90] sm:$0xff]
    %v59 = vld [vmem:[#allocation2 + $0x98] sm:$0xff]
    %v60 = vld [vmem:[#allocation2 + $0xa0] sm:$0xff]
    %v61 = vld [vmem:[#allocation2 + $0xa8] sm:$0xff]
    %v62 = vld [vmem:[#allocation2 + $0xb0] sm:$0xff]
    %v63 = vld [vmem:[#allocation2 + $0xb8] sm:$0xff]
    %v64 = vld [vmem:[#allocation2 + $0xc0] sm:$0xff]
    %v65 = vld [vmem:[#allocation2 + $0xc8] sm:$0xff]
    %v66 = vld [vmem:[#allocation2 + $0xd0] sm:$0xff]
    %v67 = vld [vmem:[#allocation2 + $0xd8] sm:$0xff]
    %v68 = vld [vmem:[#allocation2 + $0xe0] sm:$0xff]
    %v69 = vld [vmem:[#allocation2 + $0xe8] sm:$0xff]
    %v70 = vld [vmem:[#allocation2 + $0xf0] sm:$0xff]
    %v71 = vld [vmem:[#allocation2 + $0xf8] sm:$0xff]
    %v72 = vld [vmem:[#allocation2 + $0x100] sm:$0xff]
    %v73 = vld [vmem:[#allocation2 + $0x108] sm:$0xff]
    %v74 = vld [vmem:[#allocation2 + $0x110] sm:$0xff]
    %v75 = vld [vmem:[#allocation2 + $0x118] sm:$0xff]
    %v76 = vld [vmem:[#allocation2 + $0x120] sm:$0xff]
    %v77 = vld [vmem:[#allocation2 + $0x128] sm:$0xf]
    %vm78 = vcmask 359424
    %v80 = vsel %vm78, %v37, 0
    %vm82 = vcmask 1043456
    %v84 = vsel %vm82, %v77, 0
    %86 = vmatprep.subr.mxu0 0.0
    %87 = vmatpush1.msra.mxu0 %v40
    %88 = vmatprep.subr.mxu0 0.0
    %89 = vmatpush1.msra.mxu0 %v41
    %90 = vmatprep.subr.mxu0 0.0
    %91 = vmatpush1.msra.mxu0 %v42
    %92 = vmatprep.subr.mxu0 0.0
    %93 = vmatpush1.msra.mxu0 %v43
    %94 = vmatprep.subr.mxu0 0.0
    %95 = vmatpush1.msra.mxu0 %v44
    %96 = vmatprep.subr.mxu0 0.0
    %97 = vmatpush1.msra.mxu0 %v45
    %98 = vmatprep.subr.mxu0 0.0
    %99 = vmatpush1.msra.mxu0 %v46
    %100 = vmatprep.subr.mxu0 0.0
    %101 = vmatpush1.msra.mxu0 %v47
    %102 = vmatprep.subr.mxu0 0.0
    %103 = vmatpush1.msra.mxu0 %v48
    %104 = vmatprep.subr.mxu0 0.0
    %105 = vmatpush1.msra.mxu0 %v49
    %106 = vmatprep.subr.mxu0 0.0
    %107 = vmatpush1.msra.mxu0 %v50
    %108 = vmatprep.subr.mxu0 0.0
    %109 = vmatpush1.msra.mxu0 %v51
    %110 = vmatprep.subr.mxu0 0.0
    %111 = vmatpush1.msra.mxu0 %v52
    %112 = vmatprep.subr.mxu0 0.0
    %113 = vmatpush1.msra.mxu0 %v53
    %114 = vmatprep.subr.mxu0 0.0
    %115 = vmatpush1.msra.mxu0 %v54
    %116 = vmatprep.subr.mxu0 0.0
    %117 = vmatpush1.msra.mxu0 %v55
    %118 = vmatprep.subr.mxu0 0.0
    %119 = vmatpush1.msra.mxu0 %v56
    %120 = vmatprep.subr.mxu0 0.0
    %121 = vmatpush1.msra.mxu0 %v57
    %122 = vmatprep.subr.mxu0 0.0
    %123 = vmatpush1.msra.mxu0 %v58
    %124 = vmatprep.subr.mxu0 0.0
    %125 = vmatpush1.msra.mxu0 %v59
    %126 = vmatprep.subr.mxu0 0.0
    %127 = vmatpush1.msra.mxu0 %v60
    %128 = vmatprep.subr.mxu0 0.0
    %129 = vmatpush1.msra.mxu0 %v61
    %130 = vmatprep.subr.mxu0 0.0
    %131 = vmatpush1.msra.mxu0 %v62
    %132 = vmatprep.subr.mxu0 0.0
    %133 = vmatpush1.msra.mxu0 %v63
    %134 = vmatprep.subr.mxu0 0.0
    %135 = vmatpush1.msra.mxu0 %v64
    %136 = vmatprep.subr.mxu0 0.0
    %137 = vmatpush1.msra.mxu0 %v65
    %138 = vmatprep.subr.mxu0 0.0
    %139 = vmatpush1.msra.mxu0 %v66
    %140 = vmatprep.subr.mxu0 0.0
    %141 = vmatpush1.msra.mxu0 %v67
    %142 = vmatprep.subr.mxu0 0.0
    %143 = vmatpush1.msra.mxu0 %v68
    %144 = vmatprep.subr.mxu0 0.0
    %145 = vmatpush1.msra.mxu0 %v69
    %146 = vmatprep.subr.mxu0 0.0
    %147 = vmatpush1.msra.mxu0 %v70
    %148 = vmatprep.subr.mxu0 0.0
    %149 = vmatpush1.msra.mxu0 %v71
    %150 = vmatprep.mubr.f32.mxu0 %v36
    %151 = vmatmul.mubr.f32.gmra.mrb[0].mxu0 %v35
    %v152 = vpop.f32.mrb[0].mxu0
    %v153 = vadd.f32 0.0, %v152
    %v154 = vpop.f32.mrb[0].mxu0
    %155 = vdwg.mxu0
    %156 = vmatprep.subr.mxu0 0.0
    %157 = vmatpush1.msra.mxu0 %v72
    %158 = vmatprep.subr.mxu0 0.0
    %159 = vmatpush1.msra.mxu0 %v73
    %160 = vmatprep.subr.mxu0 0.0
    %161 = vmatpush1.msra.mxu0 %v74
    %162 = vmatprep.subr.mxu0 0.0
    %163 = vmatpush1.msra.mxu0 %v75
    %164 = vmatprep.subr.mxu0 0.0
    %165 = vmatpush1.msra.mxu0 %v76
    %166 = vmatprep.subr.mxu0 0.0
    %167 = vmatpush1.msra.mxu0 %v84
    %168 = vmatprep.subr.mxu0 0.0
    %169 = vmatpush1.msra.mxu0 0.0
    %170 = vmatprep.subr.mxu0 0.0
    %171 = vmatpush1.msra.mxu0 0.0
    %172 = vmatprep.subr.mxu0 0.0
    %173 = vmatpush1.msra.mxu0 0.0
    %174 = vmatprep.subr.mxu0 0.0
    %175 = vmatpush1.msra.mxu0 0.0
    %176 = vmatprep.subr.mxu0 0.0
    %177 = vmatpush1.msra.mxu0 0.0
    %178 = vmatprep.subr.mxu0 0.0
    %179 = vmatpush1.msra.mxu0 0.0
    %180 = vmatprep.subr.mxu0 0.0
    %181 = vmatpush1.msra.mxu0 0.0
    %182 = vmatprep.subr.mxu0 0.0
    %183 = vmatpush1.msra.mxu0 0.0
    %184 = vmatprep.subr.mxu0 0.0
    %185 = vmatpush1.msra.mxu0 0.0
    %186 = vmatprep.subr.mxu0 0.0
    %187 = vmatpush1.msra.mxu0 0.0
    %188 = vmatprep.subr.mxu0 0.0
    %189 = vmatpush1.msra.mxu0 0.0
    %190 = vmatprep.subr.mxu0 0.0
    %191 = vmatpush1.msra.mxu0 0.0
    %192 = vmatprep.subr.mxu0 0.0
    %193 = vmatpush1.msra.mxu0 0.0
    %194 = vmatprep.subr.mxu0 0.0
    %195 = vmatpush1.msra.mxu0 0.0
    %196 = vmatprep.subr.mxu0 0.0
    %197 = vmatpush1.msra.mxu0 0.0
    %198 = vmatprep.subr.mxu0 0.0
    %199 = vmatpush1.msra.mxu0 0.0
    %200 = vmatprep.subr.mxu0 0.0
    %201 = vmatpush1.msra.mxu0 0.0
    %202 = vmatprep.subr.mxu0 0.0
    %203 = vmatpush1.msra.mxu0 0.0
    %204 = vmatprep.subr.mxu0 0.0
    %205 = vmatpush1.msra.mxu0 0.0
    %206 = vmatprep.subr.mxu0 0.0
    %207 = vmatpush1.msra.mxu0 0.0
    %208 = vmatprep.subr.mxu0 0.0
    %209 = vmatpush1.msra.mxu0 0.0
    %210 = vmatprep.subr.mxu0 0.0
    %211 = vmatpush1.msra.mxu0 0.0
    %212 = vmatprep.subr.mxu0 0.0
    %213 = vmatpush1.msra.mxu0 0.0
    %214 = vmatprep.subr.mxu0 0.0
    %215 = vmatpush1.msra.mxu0 0.0
    %216 = vmatprep.subr.mxu0 0.0
    %217 = vmatpush1.msra.mxu0 0.0
    %218 = vmatprep.subr.mxu0 0.0
    %219 = vmatpush1.msra.mxu0 0.0
    %220 = vmatprep.mubr.f32.mxu0 0.0
    %221 = vmatmul.mubr.f32.gmra.mrb[0].mxu0 %v80
    %v222 = vpop.f32.mrb[0].mxu0
    %v223 = vadd.f32 %v153, %v222
    %v224 = vpop.f32.mrb[0].mxu0
    %225 = vdwg.mxu0
    %v226 = vrot.slane %v223, 4
    %v227 = vadd.f32 %v223, %v226
    %v228 = vrot.slane %v227, 2
    %v229 = vadd.f32 %v227, %v228
    %v230 = vrot.slane %v229, 1
    %v231 = vadd.f32 %v229, %v230
    %v232 = vmul.f32 %v231, 0.125
    %v233 = vsub.f32 %v223, %v232
    %v234 = vmul.f32 %v233, %v233
    %v235 = vrot.slane %v234, 4
    %v236 = vadd.f32 %v234, %v235
    %v237 = vrot.slane %v236, 2
    %v238 = vadd.f32 %v236, %v237
    %v239 = vrot.slane %v238, 1
    %v240 = vadd.f32 %v238, %v239
    %v241 = vmul.f32 %v240, 0.125
    %v242 = vadd.f32 %v241, 1e-05
    %v243 = vrsqrt.pop %v242
    %v244 = vmul.f32 %v38, %v243
    %v245 = vmul.f32 %v233, %v244
    %v246 = vadd.f32 %v245, %v39
    %v247 = vmax.f32 %v246, 0.0
    %v248 = vld [vmem:[%s4 + $0x2] ss:$0 sm:$0xff]
    %v249 = vld [vmem:[%s4 + $0x3] ss:$0 sm:$0xff]
    %v250 = vld [vmem:[%s2] sm:$0xff]
    %v251 = vld [vmem:[%s2 + $0x8] sm:$0xff]
    %v252 = vld [vmem:[%s2 + $0x10] sm:$0xff]
    %v253 = vld [vmem:[%s2 + $0x18] sm:$0xff]
    %v254 = vld [vmem:[%s2 + $0x20] sm:$0xff]
    %v255 = vld [vmem:[%s2 + $0x28] sm:$0xff]
    %v256 = vld [vmem:[%s2 + $0x30] sm:$0xff]
    %v257 = vld [vmem:[%s2 + $0x38] sm:$0xff]
    %v258 = vld [vmem:[%s2 + $0x40] sm:$0xff]
    %v259 = vld [vmem:[%s2 + $0x48] sm:$0xff]
    %v260 = vld [vmem:[%s2 + $0x50] sm:$0xff]
    %v261 = vld [vmem:[%s2 + $0x58] sm:$0xff]
    %v262 = vld [vmem:[%s2 + $0x60] sm:$0xff]
    %v263 = vld [vmem:[%s2 + $0x68] sm:$0xff]
    %v264 = vld [vmem:[%s2 + $0x70] sm:$0xff]
    %v265 = vld [vmem:[%s2 + $0x78] sm:$0xff]
    %266 = vmatprep.subr.mxu0 0.0
    %267 = vmatpush1.msra.mxu0 %v250
    %268 = vmatprep.subr.mxu0 0.0
    %269 = vmatpush1.msra.mxu0 %v251
    %270 = vmatprep.subr.mxu0 0.0
    %271 = vmatpush1.msra.mxu0 %v252
    %272 = vmatprep.subr.mxu0 0.0
    %273 = vmatpush1.msra.mxu0 %v253
    %274 = vmatprep.subr.mxu0 0.0
    %275 = vmatpush1.msra.mxu0 %v254
    %276 = vmatprep.subr.mxu0 0.0
    %277 = vmatpush1.msra.mxu0 %v255
    %278 = vmatprep.subr.mxu0 0.0
    %279 = vmatpush1.msra.mxu0 %v256
    %280 = vmatprep.subr.mxu0 0.0
    %281 = vmatpush1.msra.mxu0 %v257
    %282 = vmatprep.subr.mxu0 0.0
    %283 = vmatpush1.msra.mxu0 %v258
    %284 = vmatprep.subr.mxu0 0.0
    %285 = vmatpush1.msra.mxu0 %v259
    %286 = vmatprep.subr.mxu0 0.0
    %287 = vmatpush1.msra.mxu0 %v260
    %288 = vmatprep.subr.mxu0 0.0
    %289 = vmatpush1.msra.mxu0 %v261
    %290 = vmatprep.subr.mxu0 0.0
    %291 = vmatpush1.msra.mxu0 %v262
    %292 = vmatprep.subr.mxu0 0.0
    %293 = vmatpush1.msra.mxu0 %v263
    %294 = vmatprep.subr.mxu0 0.0
    %295 = vmatpush1.msra.mxu0 %v264
    %296 = vmatprep.subr.mxu0 0.0
    %297 = vmatpush1.msra.mxu0 %v265
    %298 = vmatprep.subr.mxu0 0.0
    %299 = vmatpush1.msra.mxu0 0.0
    %300 = vmatprep.subr.mxu0 0.0
    %301 = vmatpush1.msra.mxu0 0.0
    %302 = vmatprep.subr.mxu0 0.0
    %303 = vmatpush1.msra.mxu0 0.0
    %304 = vmatprep.subr.mxu0 0.0
    %305 = vmatpush1.msra.mxu0 0.0
    %306 = vmatprep.subr.mxu0 0.0
    %307 = vmatpush1.msra.mxu0 0.0
    %308 = vmatprep.subr.mxu0 0.0
    %309 = vmatpush1.msra.mxu0 0.0
    %310 = vmatprep.subr.mxu0 0.0
    %311 = vmatpush1.msra.mxu0 0.0
    %312 = vmatprep.subr.mxu0 0.0
    %313 = vmatpush1.msra.mxu0 0.0
    %314 = vmatprep.subr.mxu0 0.0
    %315 = vmatpush1.msra.mxu0 0.0
    %316 = vmatprep.subr.mxu0 0.0
    %317 = vmatpush1.msra.mxu0 0.0
    %318 = vmatprep.subr.mxu0 0.0
    %319 = vmatpush1.msra.mxu0 0.0
    %320 = vmatprep.subr.mxu0 0.0
    %321 = vmatpush1.msra.mxu0 0.0
    %322 = vmatprep.subr.mxu0 0.0
    %323 = vmatpush1.msra.mxu0 0.0
    %324 = vmatprep.subr.mxu0 0.0
    %325 = vmatpush1.msra.mxu0 0.0
    %326 = vmatprep.subr.mxu0 0.0
    %327 = vmatpush1.msra.mxu0 0.0
    %328 = vmatprep.subr.mxu0 0.0
    %329 = vmatpush1.msra.mxu0 0.0
    %330 = vmatprep.mubr.f32.mxu0 0.0
    %331 = vmatmul.mubr.f32.gmra.mrb[0].mxu0 %v247
    %v332 = vpop.f32.mrb[0].mxu0
    %v333 = vadd.f32 0.0, %v332
    %v334 = vpop.f32.mrb[0].mxu0
    %335 = vdwg.mxu0
    %vm336 = vcmask 523264
    %v337 = vsel %vm336, %v333, 0.0
    %v338 = vrot.slane %v337, 4
    %v339 = vadd.f32 %v337, %v338
    %v340 = vrot.slane %v339, 2
    %v341 = vadd.f32 %v339, %v340
    %v342 = vrot.slane %v341, 1
    %v343 = vadd.f32 %v341, %v342
    %v344 = vmul.f32 %v343, 0.125
    %v345 = vsub.f32 %v333, %v344
    %v346 = vmul.f32 %v345, %v345
    %v347 = vsel %vm336, %v346, 0.0
    %v348 = vrot.slane %v347, 4
    %v349 = vadd.f32 %v347, %v348
    %v350 = vrot.slane %v349, 2
    %v351 = vadd.f32 %v349, %v350
    %v352 = vrot.slane %v351, 1
    %v353 = vadd.f32 %v351, %v352
    %v354 = vmul.f32 %v353, 0.125
    %v355 = vadd.f32 %v354, 1e-05
    %v356 = vrsqrt.pop %v355
    %v357 = vmul.f32 %v248, %v356
    %v358 = vmul.f32 %v345, %v357
    %v359 = vadd.f32 %v358, %v249
    %v360 = vmax.f32 %v359, 0.0
    %s361 = scalar_lea.vmem %s4, 4
    %v362 = vld [vmem:[%s361] ss:$8 sm:$0x3]
    %s363 = scalar_lea.vmem %s4, 5
    %v364 = vld [vmem:[%s363] ss:$8 sm:$0x3]
    %v365 = vld [vmem:[%s3] sm:$0xff]
    %v366 = vld [vmem:[%s3 + $0x8] sm:$0xff]
    %v367 = vld [vmem:[%s3 + $0x10] sm:$0xff]
    %v368 = vld [vmem:[%s3 + $0x18] sm:$0xff]
    %v369 = vld [vmem:[%s3 + $0x20] sm:$0xff]
    %v370 = vld [vmem:[%s3 + $0x28] sm:$0xff]
    %v371 = vld [vmem:[%s3 + $0x30] sm:$0xff]
    %v372 = vld [vmem:[%s3 + $0x38] sm:$0xff]
    %v373 = vld [vmem:[%s3 + $0x40] sm:$0xff]
    %v374 = vld [vmem:[%s3 + $0x48] sm:$0xff]
    %v375 = vld [vmem:[%s3 + $0x50] sm:$0xff]
    %v376 = vld [vmem:[%s3 + $0x58] sm:$0xff]
    %v377 = vld [vmem:[%s3 + $0x60] sm:$0xff]
    %v378 = vld [vmem:[%s3 + $0x68] sm:$0xff]
    %v379 = vld [vmem:[%s3 + $0x70] sm:$0xff]
    %v380 = vld [vmem:[%s3 + $0x78] sm:$0xff]
    %v382 = vsel %vm336, %v360, 0
    %384 = vmatprep.subr.mxu0 %v366
    %385 = vmatpush1.msra.mxu0 %v365
    %386 = vmatprep.subr.mxu0 %v368
    %387 = vmatpush1.msra.mxu0 %v367
    %388 = vmatprep.subr.mxu0 %v370
    %389 = vmatpush1.msra.mxu0 %v369
    %390 = vmatprep.subr.mxu0 %v372
    %391 = vmatpush1.msra.mxu0 %v371
    %392 = vmatprep.subr.mxu0 %v374
    %393 = vmatpush1.msra.mxu0 %v373
    %394 = vmatprep.subr.mxu0 %v376
    %395 = vmatpush1.msra.mxu0 %v375
    %396 = vmatprep.subr.mxu0 %v378
    %397 = vmatpush1.msra.mxu0 %v377
    %398 = vmatprep.subr.mxu0 %v380
    %399 = vmatpush1.msra.mxu0 %v379
    %400 = vmatprep.subr.mxu0 0.0
    %401 = vmatpush1.msra.mxu0 0.0
    %402 = vmatprep.subr.mxu0 0.0
    %403 = vmatpush1.msra.mxu0 0.0
    %404 = vmatprep.subr.mxu0 0.0
    %405 = vmatpush1.msra.mxu0 0.0
    %406 = vmatprep.subr.mxu0 0.0
    %407 = vmatpush1.msra.mxu0 0.0
    %408 = vmatprep.subr.mxu0 0.0
    %409 = vmatpush1.msra.mxu0 0.0
    %410 = vmatprep.subr.mxu0 0.0
    %411 = vmatpush1.msra.mxu0 0.0
    %412 = vmatprep.subr.mxu0 0.0
    %413 = vmatpush1.msra.mxu0 0.0
    %414 = vmatprep.subr.mxu0 0.0
    %415 = vmatpush1.msra.mxu0 0.0
    %416 = vmatprep.subr.mxu0 0.0
    %417 = vmatpush1.msra.mxu0 0.0
    %418 = vmatprep.subr.mxu0 0.0
    %419 = vmatpush1.msra.mxu0 0.0
    %420 = vmatprep.subr.mxu0 0.0
    %421 = vmatpush1.msra.mxu0 0.0
    %422 = vmatprep.subr.mxu0 0.0
    %423 = vmatpush1.msra.mxu0 0.0
    %424 = vmatprep.subr.mxu0 0.0
    %425 = vmatpush1.msra.mxu0 0.0
    %426 = vmatprep.subr.mxu0 0.0
    %427 = vmatpush1.msra.mxu0 0.0
    %428 = vmatprep.subr.mxu0 0.0
    %429 = vmatpush1.msra.mxu0 0.0
    %430 = vmatprep.subr.mxu0 0.0
    %431 = vmatpush1.msra.mxu0 0.0
    %432 = vmatprep.subr.mxu0 0.0
    %433 = vmatpush1.msra.mxu0 0.0
    %434 = vmatprep.subr.mxu0 0.0
    %435 = vmatpush1.msra.mxu0 0.0
    %436 = vmatprep.subr.mxu0 0.0
    %437 = vmatpush1.msra.mxu0 0.0
    %438 = vmatprep.subr.mxu0 0.0
    %439 = vmatpush1.msra.mxu0 0.0
    %440 = vmatprep.subr.mxu0 0.0
    %441 = vmatpush1.msra.mxu0 0.0
    %442 = vmatprep.subr.mxu0 0.0
    %443 = vmatpush1.msra.mxu0 0.0
    %444 = vmatprep.subr.mxu0 0.0
    %445 = vmatpush1.msra.mxu0 0.0
    %446 = vmatprep.subr.mxu0 0.0
    %447 = vmatpush1.msra.mxu0 0.0
    %448 = vmatprep.mubr.f32.mxu0 0.0
    %449 = vmatmul.mubr.f32.gmra.mrb[0].mxu0 %v382
    %v450 = vpop.f32.mrb[0].mxu0
    %v451 = vadd.f32 0.0, %v450
    %v452 = vpop.f32.mrb[0].mxu0
    %v453 = vadd.f32 0.0, %v452
    %454 = vdwg.mxu0
    %v455 = vrot.slane %v451, 4
    %v456 = vadd.f32 %v451, %v455
    %v457 = vrot.slane %v456, 2
    %v458 = vadd.f32 %v456, %v457
    %v459 = vrot.slane %v458, 1
    %v460 = vadd.f32 %v458, %v459
    %vm461 = vcmask 998400
    %v462 = vsel %vm461, %v453, 0.0
    %v463 = vrot.slane %v462, 4
    %v464 = vadd.f32 %v462, %v463
    %v465 = vrot.slane %v464, 2
    %v466 = vadd.f32 %v464, %v465
    %v467 = vrot.slane %v466, 1
    %v468 = vadd.f32 %v466, %v467
    %v469 = vmul.f32 %v460, 0.125
    %v470 = vmul.f32 %v468, 0.125
    %v471 = vsub.f32 %v451, %v469
    %v472 = vsub.f32 %v453, %v470
    %v473 = vmul.f32 %v471, %v471
    %v474 = vmul.f32 %v472, %v472
    %v475 = vrot.slane %v473, 4
    %v476 = vadd.f32 %v473, %v475
    %v477 = vrot.slane %v476, 2
    %v478 = vadd.f32 %v476, %v477
    %v479 = vrot.slane %v478, 1
    %v480 = vadd.f32 %v478, %v479
    %v481 = vsel %vm461, %v474, 0.0
    %v482 = vrot.slane %v481, 4
    %v483 = vadd.f32 %v481, %v482
    %v484 = vrot.slane %v483, 2
    %v485 = vadd.f32 %v483, %v484
    %v486 = vrot.slane %v485, 1
    %v487 = vadd.f32 %v485, %v486
    %v488 = vmul.f32 %v480, 0.125
    %v489 = vmul.f32 %v487, 0.125
    %v490 = vadd.f32 %v488, 1e-05
    %v491 = vadd.f32 %v489, 1e-05
    %v492 = vrsqrt.pop %v490
    %v493 = vrsqrt.pop %v491
    %v496 = vcombine.low %v492, %v493
    %v498 = vunpack.c.l.s4 1966171168
    %v499 = vunpack.c.0.s8 %v498
    %v500 = vlaneseq
    %v501 = vshrl.u32 %v500, 7
    %v502 = vsub.s32 %v499, %v501
    %v503 = vrot.slane %v496, %v502
    %v505 = vunpack.c.l.s4 1966171168
    %v506 = vunpack.c.0.s8 %v505
    %v507 = vlaneseq
    %v508 = vshrl.u32 %v507, 7
    %v509 = vsub.s32 %v506, %v508
    %v510 = vrot.slane %v503, %v509
    %v512 = vmul.f32 %v362, %v510
    %v514 = vlaneseq
    %v515 = vshrl.u32 %v514, 7
    %v516 = vsub.s32 0, %v515
    %v517 = vrot.slane %v512, %v516
    %v518 = vlaneseq
    %v519 = vshrl.u32 %v518, 7
    %v520 = vsub.s32 1, %v519
    %v521 = vrot.slane %v512, %v520
    %v524 = vmul.f32 %v471, %v517
    %v525 = vmul.f32 %v472, %v521
    %v527 = vlaneseq
    %v528 = vshrl.u32 %v527, 7
    %v529 = vsub.s32 0, %v528
    %v530 = vrot.slane %v364, %v529
    %v531 = vlaneseq
    %v532 = vshrl.u32 %v531, 7
    %v533 = vsub.s32 1, %v532
    %v534 = vrot.slane %v364, %v533
    %v537 = vadd.f32 %v524, %v530
    %v538 = vadd.f32 %v525, %v534
    %v539 = vxor.u32 %v537, 2147483648
    %v540 = vxor.u32 %v538, 2147483648
    %v541 = vmul.f32 %v539, 1.442695
    %v542 = vpow.pop %v541
    %v543 = vmul.f32 %v540, 1.442695
    %v544 = vpow.pop %v543
    %v545 = vadd.f32 %v542, 1.0
    %v546 = vadd.f32 %v544, 1.0
    %v547 = vrcp.pop %v545
    %v548 = vmul.f32 1.0, %v547
    %v549 = vrcp.pop %v546
    %v550 = vmul.f32 1.0, %v549
    %551 = vst [vmem:[#allocation5] sm:$0xff] %v548
    %552 = vst.msk [vmem:[#allocation5 + $0x8] sm:$0xff] %vm461, %v550
    // Predicated region
    $region26: #{tpu_custom_call.1} parent=1 // pred_check
      _
    $region27: #{tpu_custom_call.1} parent=1 // pred_check_branch
      %554 = sbr.rel (0) target = $region29
    $region28: #{tpu_custom_call.1} parent=1 // pred_region
      %s556 = ssub.s32 256, 256
      %557 = vsyncadd [#allocation4], %s556
      %s559 = sshll.u32 [#allocation5], 4
      %s560 = int_to_ptr.vmem [resolvable:$true] %s559
      %562 = dma.vmem_to_hbm [thread:$0]  %s560, 256, %s5, [#allocation4]
    $region29: #{tpu_custom_call.1} parent=1 // pred_fallthru
      _
    // Predicated region
    $region30: #{tpu_custom_call.1} parent=1 // pred_check
      _
    $region31: #{tpu_custom_call.1} parent=1 // pred_check_branch
      %564 = sbr.rel (0) target = $region33
    $region32: #{tpu_custom_call.1} parent=1 // pred_region
      %565 = dma.done [#allocation4], 256
    $region33: #{tpu_custom_call.1} parent=1 // pred_fallthru
      _
    %566 = vsyncpa [#allocation3], 1
    %567 = vsyncpa [#allocation4], 1

</llo_original>
